<compile_context>
chip_gen: v7x
topology: tpu7x:2x2x1
jax: 0.10.0
libtpu: 0.0.40
codegen_flags: <defaults>
</compile_context>

<pallas_src>
import math
from functools import partial

import jax
import jax.numpy as jnp
from jax.experimental import pallas as pl
from jax.experimental.pallas import tpu as pltpu

# Large finite negative (bf16-safe, avoids inf-inf NaN paths in online softmax).
MASK_VALUE = -1e30


# --------------------------------------------------------------------------- #
# Kernel 1: fused QKV projection + head-major relayout.
# --------------------------------------------------------------------------- #
def qkv_proj_kernel(x_ref, w_ref, b_ref, q_ref, k_ref, v_ref, *, n_head, head_dim):
    """x_ref: (1, bt, C) [compute dtype]; w_ref: (C, 3C) [compute dtype];
    b_ref: (1, 3C) f32; q/k/v_ref: (1, H, bt, hd) [compute dtype] head-major."""
    C = n_head * head_dim
    x = x_ref[0]                                              # (bt, C)
    qkv = jnp.dot(x, w_ref[...], preferred_element_type=jnp.float32)
    qkv = (qkv + b_ref[...]).astype(q_ref.dtype)              # (bt, 3C)
    # Head-major scatter: static lane slices -> per-head stores.  Pure layout
    # plumbing done once per element here, replacing an XLA HBM round-trip.
    for h in range(n_head):
        q_ref[0, h] = qkv[:, h * head_dim:(h + 1) * head_dim]
        k_ref[0, h] = qkv[:, C + h * head_dim:C + (h + 1) * head_dim]
        v_ref[0, h] = qkv[:, 2 * C + h * head_dim:2 * C + (h + 1) * head_dim]


# --------------------------------------------------------------------------- #
# Kernel 2: flash-style causal attention + fused output projection.
# --------------------------------------------------------------------------- #
def flash_attn_proj_kernel(q_ref, k_ref, v_ref, wp_ref, bp_ref, o_ref,
                           m_scr, l_scr, acc_scr,
                           *, compute_dtype, n_head, block_q, block_kv):
    """Blocks:
      q_ref : (1, H, tq,  hd)   (1/sqrt(hd) already folded into W_q)
      k_ref : (1, H, tkv, hd)   (kv block index clamped to <= qi by index_map)
      v_ref : (1, H, tkv, hd)
      wp_ref: (H, hd, C)        head-major c_proj weight [compute dtype]
      bp_ref: (1, C)            f32
      o_ref : (1, tq, C)        lane-dense output block
    Scratch (persist across the kv grid axis):
      m_scr/l_scr: (H, tq, 1) f32 ; acc_scr: (H, tq, hd) f32
    """
    qi = pl.program_id(1)
    ki = pl.program_id(2)

    @pl.when(ki == 0)
    def _init():
        m_scr[...] = jnp.full_like(m_scr, MASK_VALUE)
        l_scr[...] = jnp.zeros_like(l_scr)
        acc_scr[...] = jnp.zeros_like(acc_scr)

    def _online_update(masked):
        q = q_ref[0]                                          # (H, tq, hd)
        k = k_ref[0]                                          # (H, tkv, hd)
        v = v_ref[0]                                          # (H, tkv, hd)
        # Batched over heads, contraction on hd — no per-head loop / lane slicing.
        s = jnp.einsum('hqd,hkd->hqk', q, k,
                       preferred_element_type=jnp.float32)    # (H, tq, tkv) f32
        if masked:
            # Local lower-triangular mask — only the diagonal block needs it
            # (block_q == block_kv).  Every row keeps >= 1 unmasked column.
            row = jax.lax.broadcasted_iota(jnp.int32, (block_q, block_kv), 0)
            col = jax.lax.broadcasted_iota(jnp.int32, (block_q, block_kv), 1)
            s = jnp.where((col <= row)[None, :, :], s, MASK_VALUE)
        m_prev = m_scr[...]                                   # (H, tq, 1)
        m_new = jnp.maximum(m_prev, jnp.max(s, axis=-1, keepdims=True))
        alpha = jnp.exp(m_prev - m_new)
        p = jnp.exp(s - m_new)                                # (H, tq, tkv) f32
        l_scr[...] = alpha * l_scr[...] + jnp.sum(p, axis=-1, keepdims=True)
        acc_scr[...] = alpha * acc_scr[...] + jnp.einsum(
            'hqk,hkd->hqd', p.astype(compute_dtype), v,
            preferred_element_type=jnp.float32)               # (H, tq, hd) f32
        m_scr[...] = m_new

    # Strictly below the diagonal: no mask iota/compare/select at all.
    @pl.when(ki < qi)
    def _below_diag():
        _online_update(masked=False)

    # Diagonal block: masked update, then finalize immediately (early finalize —
    # remaining ki > qi steps are dead iterations with no DMA and no compute).
    @pl.when(ki == qi)
    def _diag_and_finalize():
        _online_update(masked=True)
        # Softmax normalization via the EUP approximate reciprocal.
        inv_l = pl.reciprocal(l_scr[...], approx=True)        # (H, tq, 1)
        y = (acc_scr[...] * inv_l).astype(compute_dtype)      # (H, tq, hd)
        # Fused output projection: per-head (tq,hd)@(hd,C) accumulated into one
        # (tq, C) f32 value — no (H, tq, C) intermediate, no separate head-sum.
        out = jnp.dot(y[0], wp_ref[0], preferred_element_type=jnp.float32)
        for h in range(1, n_head):
            out = out + jnp.dot(y[h], wp_ref[h],
                                preferred_element_type=jnp.float32)
        o_ref[0] = (out + bp_ref[...]).astype(o_ref.dtype)    # lane-dense (tq, C)


# --------------------------------------------------------------------------- #
# Wrapper
# --------------------------------------------------------------------------- #
def causal_self_attention(x, w_qkv, b_qkv, w_proj, b_proj, *, n_head,
                          compute_dtype=jnp.bfloat16,
                          block_t=None, block_q=None, block_kv=None,
                          out_dtype=None):
    """x: (B, T, C). w_qkv: (C, 3C), b_qkv: (3C,), w_proj: (C, C), b_proj: (C,)
    (weights stored (in, out) == PyTorch weight transposed)."""
    B, T, C = x.shape
    H = n_head
    assert C % H == 0
    hd = C // H
    out_dtype = x.dtype if out_dtype is None else out_dtype

    if block_t is None:
        block_t = min(T, 256)
    if block_q is None:
        block_q = min(T, 128)   # tune per generation: 128 (v5e) / 256 (v6e, v7x if VMEM allows)
    if block_kv is None:
        block_kv = block_q
    assert block_q == block_kv, "diagonal-block causal mask assumes square q/kv tiles"
    assert T % block_t == 0 and T % block_q == 0

    # Fold the 1/sqrt(hd) softmax scale into the Q columns of W_qkv / b_qkv
    # (zero runtime cost vs scaling the (T, T) score matrix).
    scale = 1.0 / math.sqrt(hd)
    scale_row = jnp.concatenate(
        [jnp.full((C,), scale, jnp.float32), jnp.ones((2 * C,), jnp.float32)])
    w_qkv_s = (w_qkv.astype(jnp.float32) * scale_row[None, :]).astype(compute_dtype)
    b_qkv_s = (b_qkv.astype(jnp.float32) * scale_row).reshape(1, 3 * C)

    # Pre-cast activations: halves kernel-1 input HBM bytes vs reading f32.
    x_c = x.astype(compute_dtype)

    # ---- Kernel 1: fused QKV projection, head-major outputs (B, H, T, hd) ----
    q, k, v = pl.pallas_call(
        partial(qkv_proj_kernel, n_head=H, head_dim=hd),
        out_shape=(jax.ShapeDtypeStruct((B, H, T, hd), compute_dtype),
                   jax.ShapeDtypeStruct((B, H, T, hd), compute_dtype),
                   jax.ShapeDtypeStruct((B, H, T, hd), compute_dtype)),
        grid=(B, T // block_t),
        in_specs=[
            pl.BlockSpec((1, block_t, C), lambda b, t: (b, t, 0)),
            # constant index_map -> fetched once; (pl.Buffered(1) would also
            # reclaim the second weight buffer if VMEM gets tight)
            pl.BlockSpec((C, 3 * C), lambda b, t: (0, 0)),
            pl.BlockSpec((1, 3 * C), lambda b, t: (0, 0)),
        ],
        out_specs=[
            pl.BlockSpec((1, H, block_t, hd), lambda b, t: (b, 0, t, 0)),
            pl.BlockSpec((1, H, block_t, hd), lambda b, t: (b, 0, t, 0)),
            pl.BlockSpec((1, H, block_t, hd), lambda b, t: (b, 0, t, 0)),
        ],
        compiler_params=pltpu.CompilerParams(
            dimension_semantics=("parallel", "parallel")),
    )(x_c, w_qkv_s, b_qkv_s)

    w_proj_h = w_proj.reshape(H, hd, C).astype(compute_dtype)   # head-major c_proj
    b_proj_2d = b_proj.reshape(1, C).astype(jnp.float32)

    # Clamp the kv block index to the diagonal: dead (ki > qi) tiles map to the
    # same block index as the previous step, so Pallas issues no DMA for them.
    def kv_index(b, qi, ki):
        return (b, 0, jnp.minimum(ki, qi), 0)

    # ---- Kernel 2: flash attention + fused output projection ----
    out = pl.pallas_call(
        partial(flash_attn_proj_kernel, compute_dtype=compute_dtype,
                n_head=H, block_q=block_q, block_kv=block_kv),
        out_shape=jax.ShapeDtypeStruct((B, T, C), out_dtype),
        grid=(B, T // block_q, T // block_kv),
        in_specs=[
            pl.BlockSpec((1, H, block_q, hd), lambda b, qi, ki: (b, 0, qi, 0)),
            pl.BlockSpec((1, H, block_kv, hd), kv_index),
            pl.BlockSpec((1, H, block_kv, hd), kv_index),
            pl.BlockSpec((H, hd, C), lambda b, qi, ki: (0, 0, 0)),
            pl.BlockSpec((1, C), lambda b, qi, ki: (0, 0)),
        ],
        out_specs=pl.BlockSpec((1, block_q, C), lambda b, qi, ki: (b, qi, 0)),
        scratch_shapes=[
            pltpu.VMEM((H, block_q, 1), jnp.float32),    # running max m
            pltpu.VMEM((H, block_q, 1), jnp.float32),    # running denom l
            pltpu.VMEM((H, block_q, hd), jnp.float32),   # running acc
        ],
        compiler_params=pltpu.CompilerParams(
            dimension_semantics=("parallel", "parallel", "arbitrary")),
    )(q, k, v, w_proj_h, b_proj_2d)
    return out


# --------------------------------------------------------------------------- #
# Pure-JAX reference (mirrors the PyTorch forward, eval mode, f32).
# --------------------------------------------------------------------------- #
def reference_attention(x, w_qkv, b_qkv, w_proj, b_proj, *, n_head):
    B, T, C = x.shape
    hd = C // n_head
    qkv = x @ w_qkv + b_qkv
    q, k, v = jnp.split(qkv, 3, axis=-1)

    def heads(t):
        return t.reshape(B, T, n_head, hd).transpose(0, 2, 1, 3)  # (B, H, T, hd)

    q, k, v = heads(q), heads(k), heads(v)
    att = (q @ k.transpose(0, 1, 3, 2)) / math.sqrt(hd)
    mask = jnp.tril(jnp.ones((T, T), dtype=bool))
    att = jnp.where(mask[None, None], att, -jnp.inf)
    att = jax.nn.softmax(att, axis=-1)
    y = att @ v
    y = y.transpose(0, 2, 1, 3).reshape(B, T, C)
    return y @ w_proj + b_proj


if __name__ == "__main__":
    # Small config that still exercises multiple q/kv tiles (causal skip, clamped
    # DMA, early finalize): T = 64, block_q = block_kv = 16 -> 4x4 kv grid.
    B, T, C, n_head = 2, 64, 32, 4

    key = jax.random.PRNGKey(0)
    kx, kw1, kb1, kw2, kb2 = jax.random.split(key, 5)

    x = jax.random.normal(kx, (B, T, C), dtype=jnp.float32)

    bound = 1.0 / math.sqrt(C)   # nn.Linear default init bound
    w_qkv = jax.random.uniform(kw1, (C, 3 * C), jnp.float32, -bound, bound)
    b_qkv = jax.random.uniform(kb1, (3 * C,), jnp.float32, -bound, bound)
    w_proj = jax.random.uniform(kw2, (C, C), jnp.float32, -bound, bound)
    b_proj = jax.random.uniform(kb2, (C,), jnp.float32, -bound, bound)

    ref = reference_attention(x, w_qkv, b_qkv, w_proj, b_proj, n_head=n_head)

    # f32 compute path: validates the flash / head-major / causal-skip algorithm.
    out_f32 = causal_self_attention(x, w_qkv, b_qkv, w_proj, b_proj,
                                    n_head=n_head, compute_dtype=jnp.float32,
                                    block_t=32, block_q=16, block_kv=16)
    out_f32 = jax.block_until_ready(out_f32)
    assert out_f32.shape == (B, T, C)
    assert jnp.allclose(out_f32, ref, atol=5e-3, rtol=5e-3), "f32 path mismatch"

    # bf16 MXU path (default): validates the fast path within bf16 tolerance.
    out_bf16 = causal_self_attention(x, w_qkv, b_qkv, w_proj, b_proj,
                                     n_head=n_head, compute_dtype=jnp.bfloat16,
                                     block_t=32, block_q=16, block_kv=16)
    out_bf16 = jax.block_until_ready(out_bf16)
    assert out_bf16.shape == (B, T, C)
    assert jnp.allclose(out_bf16, ref, atol=6e-2, rtol=6e-2), "bf16 path mismatch"

    print("KERNEL_OK")
</pallas_src>

<mosaic_0001>
module attributes {stable_mosaic.version = 11 : i64} {
  func.func @qkv_proj_kernel(%arg0: i32, %arg1: i32, %arg2: memref<1x32x32xf32, #tpu.memory_space<vmem>>, %arg3: memref<32x96xf32, #tpu.memory_space<vmem>>, %arg4: memref<1x96xf32, #tpu.memory_space<vmem>>, %arg5: memref<1x4x32x8xf32, #tpu.memory_space<vmem>>, %arg6: memref<1x4x32x8xf32, #tpu.memory_space<vmem>>, %arg7: memref<1x4x32x8xf32, #tpu.memory_space<vmem>>) attributes {dimension_semantics = [#tpu.dimension_semantics<parallel>, #tpu.dimension_semantics<parallel>], iteration_bounds = array<i64: 2, 2>, scalar_prefetch = 0 : i64, scratch_operands = 0 : i64, tpu.core_type = #tpu.core_type<tc>, window_params = [{transform_indices = @transform_0, window_bounds = array<i64: 1, 32, 32>}, {pipeline_mode = #tpu.pipeline_mode<synchronous>, transform_indices = @transform_1, window_bounds = array<i64: 32, 96>}, {pipeline_mode = #tpu.pipeline_mode<synchronous>, transform_indices = @transform_2, window_bounds = array<i64: 1, 96>}, {transform_indices = @transform_3, window_bounds = array<i64: 1, 4, 32, 8>}, {transform_indices = @transform_4, window_bounds = array<i64: 1, 4, 32, 8>}, {transform_indices = @transform_5, window_bounds = array<i64: 1, 4, 32, 8>}]} {
    %c0 = arith.constant 0 : index
    %c0_0 = arith.constant 0 : index
    %c0_1 = arith.constant 0 : index
    %0 = vector.load %arg2[%c0, %c0_0, %c0_1] : memref<1x32x32xf32, #tpu.memory_space<vmem>>, vector<1x32x32xf32>
    %1 = vector.shape_cast %0 : vector<1x32x32xf32> to vector<32x32xf32>
    %c0_2 = arith.constant 0 : index
    %c0_3 = arith.constant 0 : index
    %2 = vector.load %arg3[%c0_2, %c0_3] : memref<32x96xf32, #tpu.memory_space<vmem>>, vector<32x96xf32>
    %cst = arith.constant dense<0.000000e+00> : vector<32x96xf32>
    %3 = tpu.matmul %1, %2, %cst {dimension_numbers = #tpu.dot_dimension_numbers<[1], [0], [0], [1], [0, 0, 1, 1], [], []>} : vector<32x32xf32>, vector<32x96xf32>, vector<32x96xf32> -> vector<32x96xf32>
    %c0_4 = arith.constant 0 : index
    %c0_5 = arith.constant 0 : index
    %4 = vector.load %arg4[%c0_4, %c0_5] : memref<1x96xf32, #tpu.memory_space<vmem>>, vector<1x96xf32>
    %5 = vector.broadcast %4 : vector<1x96xf32> to vector<32x96xf32>
    %6 = arith.addf %3, %5 : vector<32x96xf32>
    %7 = vector.extract_strided_slice %6 {offsets = [0, 0], sizes = [32, 8], strides = [1, 1]} : vector<32x96xf32> to vector<32x8xf32>
    %c0_6 = arith.constant 0 : index
    %c0_7 = arith.constant 0 : index
    %c0_8 = arith.constant 0 : index
    %c0_9 = arith.constant 0 : index
    %8 = vector.load %arg5[%c0_6, %c0_7, %c0_8, %c0_9] : memref<1x4x32x8xf32, #tpu.memory_space<vmem>>, vector<1x1x32x8xf32>
    %9 = vector.shape_cast %8 : vector<1x1x32x8xf32> to vector<32x8xf32>
    %10 = vector.shape_cast %7 : vector<32x8xf32> to vector<1x1x32x8xf32>
    tpu.vector_store %arg5[%c0_6, %c0_7, %c0_8, %c0_9], %10 {strides = array<i32>} : memref<1x4x32x8xf32, #tpu.memory_space<vmem>>, vector<1x1x32x8xf32>,
    %11 = vector.extract_strided_slice %6 {offsets = [0, 32], sizes = [32, 8], strides = [1, 1]} : vector<32x96xf32> to vector<32x8xf32>
    %c0_10 = arith.constant 0 : index
    %c0_11 = arith.constant 0 : index
    %c0_12 = arith.constant 0 : index
    %c0_13 = arith.constant 0 : index
    %12 = vector.load %arg6[%c0_10, %c0_11, %c0_12, %c0_13] : memref<1x4x32x8xf32, #tpu.memory_space<vmem>>, vector<1x1x32x8xf32>
    %13 = vector.shape_cast %12 : vector<1x1x32x8xf32> to vector<32x8xf32>
    %14 = vector.shape_cast %11 : vector<32x8xf32> to vector<1x1x32x8xf32>
    tpu.vector_store %arg6[%c0_10, %c0_11, %c0_12, %c0_13], %14 {strides = array<i32>} : memref<1x4x32x8xf32, #tpu.memory_space<vmem>>, vector<1x1x32x8xf32>,
    %15 = vector.extract_strided_slice %6 {offsets = [0, 64], sizes = [32, 8], strides = [1, 1]} : vector<32x96xf32> to vector<32x8xf32>
    %c0_14 = arith.constant 0 : index
    %c0_15 = arith.constant 0 : index
    %c0_16 = arith.constant 0 : index
    %c0_17 = arith.constant 0 : index
    %16 = vector.load %arg7[%c0_14, %c0_15, %c0_16, %c0_17] : memref<1x4x32x8xf32, #tpu.memory_space<vmem>>, vector<1x1x32x8xf32>
    %17 = vector.shape_cast %16 : vector<1x1x32x8xf32> to vector<32x8xf32>
    %18 = vector.shape_cast %15 : vector<32x8xf32> to vector<1x1x32x8xf32>
    tpu.vector_store %arg7[%c0_14, %c0_15, %c0_16, %c0_17], %18 {strides = array<i32>} : memref<1x4x32x8xf32, #tpu.memory_space<vmem>>, vector<1x1x32x8xf32>,
    %19 = vector.extract_strided_slice %6 {offsets = [0, 8], sizes = [32, 8], strides = [1, 1]} : vector<32x96xf32> to vector<32x8xf32>
    %c0_18 = arith.constant 0 : index
    %c1 = arith.constant 1 : index
    %c0_19 = arith.constant 0 : index
    %c0_20 = arith.constant 0 : index
    %20 = vector.load %arg5[%c0_18, %c1, %c0_19, %c0_20] : memref<1x4x32x8xf32, #tpu.memory_space<vmem>>, vector<1x1x32x8xf32>
    %21 = vector.shape_cast %20 : vector<1x1x32x8xf32> to vector<32x8xf32>
    %22 = vector.shape_cast %19 : vector<32x8xf32> to vector<1x1x32x8xf32>
    tpu.vector_store %arg5[%c0_18, %c1, %c0_19, %c0_20], %22 {strides = array<i32>} : memref<1x4x32x8xf32, #tpu.memory_space<vmem>>, vector<1x1x32x8xf32>,
    %23 = vector.extract_strided_slice %6 {offsets = [0, 40], sizes = [32, 8], strides = [1, 1]} : vector<32x96xf32> to vector<32x8xf32>
    %c0_21 = arith.constant 0 : index
    %c1_22 = arith.constant 1 : index
    %c0_23 = arith.constant 0 : index
    %c0_24 = arith.constant 0 : index
    %24 = vector.load %arg6[%c0_21, %c1_22, %c0_23, %c0_24] : memref<1x4x32x8xf32, #tpu.memory_space<vmem>>, vector<1x1x32x8xf32>
    %25 = vector.shape_cast %24 : vector<1x1x32x8xf32> to vector<32x8xf32>
    %26 = vector.shape_cast %23 : vector<32x8xf32> to vector<1x1x32x8xf32>
    tpu.vector_store %arg6[%c0_21, %c1_22, %c0_23, %c0_24], %26 {strides = array<i32>} : memref<1x4x32x8xf32, #tpu.memory_space<vmem>>, vector<1x1x32x8xf32>,
    %27 = vector.extract_strided_slice %6 {offsets = [0, 72], sizes = [32, 8], strides = [1, 1]} : vector<32x96xf32> to vector<32x8xf32>
    %c0_25 = arith.constant 0 : index
    %c1_26 = arith.constant 1 : index
    %c0_27 = arith.constant 0 : index
    %c0_28 = arith.constant 0 : index
    %28 = vector.load %arg7[%c0_25, %c1_26, %c0_27, %c0_28] : memref<1x4x32x8xf32, #tpu.memory_space<vmem>>, vector<1x1x32x8xf32>
    %29 = vector.shape_cast %28 : vector<1x1x32x8xf32> to vector<32x8xf32>
    %30 = vector.shape_cast %27 : vector<32x8xf32> to vector<1x1x32x8xf32>
    tpu.vector_store %arg7[%c0_25, %c1_26, %c0_27, %c0_28], %30 {strides = array<i32>} : memref<1x4x32x8xf32, #tpu.memory_space<vmem>>, vector<1x1x32x8xf32>,
    %31 = vector.extract_strided_slice %6 {offsets = [0, 16], sizes = [32, 8], strides = [1, 1]} : vector<32x96xf32> to vector<32x8xf32>
    %c0_29 = arith.constant 0 : index
    %c2 = arith.constant 2 : index
    %c0_30 = arith.constant 0 : index
    %c0_31 = arith.constant 0 : index
    %32 = vector.load %arg5[%c0_29, %c2, %c0_30, %c0_31] : memref<1x4x32x8xf32, #tpu.memory_space<vmem>>, vector<1x1x32x8xf32>
    %33 = vector.shape_cast %32 : vector<1x1x32x8xf32> to vector<32x8xf32>
    %34 = vector.shape_cast %31 : vector<32x8xf32> to vector<1x1x32x8xf32>
    tpu.vector_store %arg5[%c0_29, %c2, %c0_30, %c0_31], %34 {strides = array<i32>} : memref<1x4x32x8xf32, #tpu.memory_space<vmem>>, vector<1x1x32x8xf32>,
    %35 = vector.extract_strided_slice %6 {offsets = [0, 48], sizes = [32, 8], strides = [1, 1]} : vector<32x96xf32> to vector<32x8xf32>
    %c0_32 = arith.constant 0 : index
    %c2_33 = arith.constant 2 : index
    %c0_34 = arith.constant 0 : index
    %c0_35 = arith.constant 0 : index
    %36 = vector.load %arg6[%c0_32, %c2_33, %c0_34, %c0_35] : memref<1x4x32x8xf32, #tpu.memory_space<vmem>>, vector<1x1x32x8xf32>
    %37 = vector.shape_cast %36 : vector<1x1x32x8xf32> to vector<32x8xf32>
    %38 = vector.shape_cast %35 : vector<32x8xf32> to vector<1x1x32x8xf32>
    tpu.vector_store %arg6[%c0_32, %c2_33, %c0_34, %c0_35], %38 {strides = array<i32>} : memref<1x4x32x8xf32, #tpu.memory_space<vmem>>, vector<1x1x32x8xf32>,
    %39 = vector.extract_strided_slice %6 {offsets = [0, 80], sizes = [32, 8], strides = [1, 1]} : vector<32x96xf32> to vector<32x8xf32>
    %c0_36 = arith.constant 0 : index
    %c2_37 = arith.constant 2 : index
    %c0_38 = arith.constant 0 : index
    %c0_39 = arith.constant 0 : index
    %40 = vector.load %arg7[%c0_36, %c2_37, %c0_38, %c0_39] : memref<1x4x32x8xf32, #tpu.memory_space<vmem>>, vector<1x1x32x8xf32>
    %41 = vector.shape_cast %40 : vector<1x1x32x8xf32> to vector<32x8xf32>
    %42 = vector.shape_cast %39 : vector<32x8xf32> to vector<1x1x32x8xf32>
    tpu.vector_store %arg7[%c0_36, %c2_37, %c0_38, %c0_39], %42 {strides = array<i32>} : memref<1x4x32x8xf32, #tpu.memory_space<vmem>>, vector<1x1x32x8xf32>,
    %43 = vector.extract_strided_slice %6 {offsets = [0, 24], sizes = [32, 8], strides = [1, 1]} : vector<32x96xf32> to vector<32x8xf32>
    %c0_40 = arith.constant 0 : index
    %c3 = arith.constant 3 : index
    %c0_41 = arith.constant 0 : index
    %c0_42 = arith.constant 0 : index
    %44 = vector.load %arg5[%c0_40, %c3, %c0_41, %c0_42] : memref<1x4x32x8xf32, #tpu.memory_space<vmem>>, vector<1x1x32x8xf32>
    %45 = vector.shape_cast %44 : vector<1x1x32x8xf32> to vector<32x8xf32>
    %46 = vector.shape_cast %43 : vector<32x8xf32> to vector<1x1x32x8xf32>
    tpu.vector_store %arg5[%c0_40, %c3, %c0_41, %c0_42], %46 {strides = array<i32>} : memref<1x4x32x8xf32, #tpu.memory_space<vmem>>, vector<1x1x32x8xf32>,
    %47 = vector.extract_strided_slice %6 {offsets = [0, 56], sizes = [32, 8], strides = [1, 1]} : vector<32x96xf32> to vector<32x8xf32>
    %c0_43 = arith.constant 0 : index
    %c3_44 = arith.constant 3 : index
    %c0_45 = arith.constant 0 : index
    %c0_46 = arith.constant 0 : index
    %48 = vector.load %arg6[%c0_43, %c3_44, %c0_45, %c0_46] : memref<1x4x32x8xf32, #tpu.memory_space<vmem>>, vector<1x1x32x8xf32>
    %49 = vector.shape_cast %48 : vector<1x1x32x8xf32> to vector<32x8xf32>
    %50 = vector.shape_cast %47 : vector<32x8xf32> to vector<1x1x32x8xf32>
    tpu.vector_store %arg6[%c0_43, %c3_44, %c0_45, %c0_46], %50 {strides = array<i32>} : memref<1x4x32x8xf32, #tpu.memory_space<vmem>>, vector<1x1x32x8xf32>,
    %51 = vector.extract_strided_slice %6 {offsets = [0, 88], sizes = [32, 8], strides = [1, 1]} : vector<32x96xf32> to vector<32x8xf32>
    %c0_47 = arith.constant 0 : index
    %c3_48 = arith.constant 3 : index
    %c0_49 = arith.constant 0 : index
    %c0_50 = arith.constant 0 : index
    %52 = vector.load %arg7[%c0_47, %c3_48, %c0_49, %c0_50] : memref<1x4x32x8xf32, #tpu.memory_space<vmem>>, vector<1x1x32x8xf32>
    %53 = vector.shape_cast %52 : vector<1x1x32x8xf32> to vector<32x8xf32>
    %54 = vector.shape_cast %51 : vector<32x8xf32> to vector<1x1x32x8xf32>
    tpu.vector_store %arg7[%c0_47, %c3_48, %c0_49, %c0_50], %54 {strides = array<i32>} : memref<1x4x32x8xf32, #tpu.memory_space<vmem>>, vector<1x1x32x8xf32>,
    return
  }
  func.func @transform_0(%arg0: i32, %arg1: i32) -> (i32, i32, i32) {
    %c0_i32 = arith.constant 0 : i32
    %c0_i32_0 = arith.constant 0 : i32
    return %arg0, %arg1, %c0_i32 : i32, i32, i32
  }
  func.func @transform_1(%arg0: i32, %arg1: i32) -> (i32, i32) {
    %c0_i32 = arith.constant 0 : i32
    %c0_i32_0 = arith.constant 0 : i32
    %c0_i32_1 = arith.constant 0 : i32
    return %c0_i32, %c0_i32_0 : i32, i32
  }
  func.func @transform_2(%arg0: i32, %arg1: i32) -> (i32, i32) {
    %c0_i32 = arith.constant 0 : i32
    %c0_i32_0 = arith.constant 0 : i32
    %c0_i32_1 = arith.constant 0 : i32
    return %c0_i32, %c0_i32_0 : i32, i32
  }
  func.func @transform_3(%arg0: i32, %arg1: i32) -> (i32, i32, i32, i32) {
    %c0_i32 = arith.constant 0 : i32
    %c0_i32_0 = arith.constant 0 : i32
    %c0_i32_1 = arith.constant 0 : i32
    return %arg0, %c0_i32, %arg1, %c0_i32_0 : i32, i32, i32, i32
  }
  func.func @transform_4(%arg0: i32, %arg1: i32) -> (i32, i32, i32, i32) {
    %c0_i32 = arith.constant 0 : i32
    %c0_i32_0 = arith.constant 0 : i32
    %c0_i32_1 = arith.constant 0 : i32
    return %arg0, %c0_i32, %arg1, %c0_i32_0 : i32, i32, i32, i32
  }
  func.func @transform_5(%arg0: i32, %arg1: i32) -> (i32, i32, i32, i32) {
    %c0_i32 = arith.constant 0 : i32
    %c0_i32_0 = arith.constant 0 : i32
    %c0_i32_1 = arith.constant 0 : i32
    return %arg0, %c0_i32, %arg1, %c0_i32_0 : i32, i32, i32, i32
  }
}

</mosaic_0001>

<llo_original>
// kernel: tpu_custom_call.1
$region0: #{tpu_custom_call.1}
  #allocation0 [shape = 'u32[]', space=smem, size = 0x4, offset = 0x4, fixed_abs, tag = 'smem constant byte address 0x4 - core index']
  #allocation1 [shape = 'u32[144,128]{1,0:T(1,128)}', space=vmem, size = 0x12000, scoped, tag = 'internal scratch']
  %s0 = inlined_call_operand.vmem [shape: f32[2,64,32], index: 0, kind: input, shape index: {}]
  %s1 = inlined_call_operand.vmem [shape: f32[32,96], index: 1, kind: input, shape index: {}]
  %s2 = inlined_call_operand.vmem [shape: f32[1,96], index: 2, kind: input, shape index: {}]
  %s3 = inlined_call_operand.vmem [shape: f32[2,4,64,8], index: 3, kind: output, shape index: {0}]
  %s4 = inlined_call_operand.vmem [shape: f32[2,4,64,8], index: 4, kind: output, shape index: {1}]
  %s5 = inlined_call_operand.vmem [shape: f32[2,4,64,8], index: 5, kind: output, shape index: {2}]
  %6 = xla_tuple %s3, %s4, %s5
  %s7 = sld [smem:[#allocation0]]
  $region163: #{tpu_custom_call.1} parent=0
    _
  %s9 = ssub.s32 1, %s7
  %s10 = scalar_select 0, %s9, %s7
  $region1: #{tpu_custom_call.1} parent=0
    #allocation2 [shape = 'u8[131072]{0}', space=vmem, size = 0x20000, scoped, tag = 'output window, operand 0']
    #allocation3 [shape = 'u8[131072]{0}', space=vmem, size = 0x20000, scoped, tag = 'output window, operand 1']
    #allocation4 [shape = 'u8[131072]{0}', space=vmem, size = 0x20000, scoped, tag = 'output window, operand 2']
    loop: start=0, step=1, limit=6
    $region2: #{tpu_custom_call.1} parent=1 // loop_pre_header
      _
    $region3: #{tpu_custom_call.1} parent=1 // loop_header
      %s12 = sphi 0, %s16
      %p13 = scmp.ge.s32.totalorder %s12, 6
      %s19 = sphi 0, %s31
      %s20 = sphi 0, %s27
      %s21 = sphi 0, %s19
      %s22 = sphi 0, %s20
      %s23 = sphi 0, %s21
      %s24 = sphi 0, %s22
      %s36 = sphi 0, %s38
      %s39 = sphi 0, %s36
      %s40 = sphi 0, %s39
      %s56 = sphi 0, %s40
      %s60 = sphi 0, %s60
      %s62 = sphi 0, %s60
      %s63 = sphi 0, %s62
      %s77 = sphi 0, %s63
      %s81 = sphi 0, %s81
      %s83 = sphi 0, %s81
      %s84 = sphi 0, %s83
      %s98 = sphi 0, %s84
      %s106 = sphi 0, %s108
      %s109 = sphi 0, %s106
      %s110 = sphi 0, %s109
      %s126 = sphi 0, %s110
      %s134 = sphi 0, %s136
      %s137 = sphi 0, %s134
      %s138 = sphi 0, %s137
      %s154 = sphi 0, %s138
      %s162 = sphi 0, %s164
      %s165 = sphi 0, %s162
      %s166 = sphi 0, %s165
      %s182 = sphi 0, %s166
    $region4: #{tpu_custom_call.1} parent=1 // loop_header_branch
      %15 = sbr.rel (%p13) target = $region8
    $region5: #{tpu_custom_call.1} parent=1 // loop_body
      %s17 = ssub.s32 %s12, 1
      %s18 = ssub.s32 %s12, 2
      %s25 = sadd.s32 1, %s20
      %p26 = scmp.ge.s32.totalorder %s25, 2
      %s27 = scalar_select %p26, 0, %s25
      %s28 = sadd.s32 1, %s19
      %s29 = scalar_select %p26, %s28, %s19
      %p30 = scmp.ge.s32.totalorder %s29, 2
      %s31 = scalar_select %p30, 0, %s29
      %s32 = ssub.s32 %s19, %s31
      %s33 = ssub.s32 %s20, %s27
      %s34 = sor.u32 %s32, %s33
      %p35 = scmp.eq.s32.totalorder %s34, 0
      %s37 = sadd.s32 %s36, 1
      %s38 = scalar_select %p35, %s36, %s37
      %p41 = pneg %p35
      %p42 = scmp.eq.s32.totalorder %s12, 3
      %p43 = por %p41, %p42
      %p44 = scmp.ne.s32.totalorder %s36, %s39
      %p45 = scmp.eq.s32.totalorder %s12, 0
      %p46 = por %p44, %p45
      %p47 = scmp.ne.s32.totalorder %s36, %s39
      %p48 = scmp.eq.s32.totalorder %s17, 3
      %p49 = por %p47, %p48
      %p50 = scmp.ne.s32.totalorder %s39, %s40
      %p51 = scmp.eq.s32.totalorder %s17, 0
      %p52 = por %p50, %p51
      %p53 = scmp.ne.s32.totalorder %s39, %s40
      %p54 = scmp.eq.s32.totalorder %s18, 3
      %p55 = por %p53, %p54
      %p57 = scmp.ne.s32.totalorder %s40, %s56
      %p58 = scmp.eq.s32.totalorder %s18, 0
      %p59 = por %p57, %p58
      %s61 = sadd.s32 %s60, 1
      %p64 = scmp.eq.s32.totalorder %s12, 3
      %p65 = scmp.ne.s32.totalorder %s60, %s62
      %p66 = scmp.eq.s32.totalorder %s12, 0
      %p67 = por %p65, %p66
      %p68 = scmp.ne.s32.totalorder %s60, %s62
      %p69 = scmp.eq.s32.totalorder %s17, 3
      %p70 = por %p68, %p69
      %p71 = scmp.ne.s32.totalorder %s62, %s63
      %p72 = scmp.eq.s32.totalorder %s17, 0
      %p73 = por %p71, %p72
      %p74 = scmp.ne.s32.totalorder %s62, %s63
      %p75 = scmp.eq.s32.totalorder %s18, 3
      %p76 = por %p74, %p75
      %p78 = scmp.ne.s32.totalorder %s63, %s77
      %p79 = scmp.eq.s32.totalorder %s18, 0
      %p80 = por %p78, %p79
      %s82 = sadd.s32 %s81, 1
      %p85 = scmp.eq.s32.totalorder %s12, 3
      %p86 = scmp.ne.s32.totalorder %s81, %s83
      %p87 = scmp.eq.s32.totalorder %s12, 0
      %p88 = por %p86, %p87
      %p89 = scmp.ne.s32.totalorder %s81, %s83
      %p90 = scmp.eq.s32.totalorder %s17, 3
      %p91 = por %p89, %p90
      %p92 = scmp.ne.s32.totalorder %s83, %s84
      %p93 = scmp.eq.s32.totalorder %s17, 0
      %p94 = por %p92, %p93
      %p95 = scmp.ne.s32.totalorder %s83, %s84
      %p96 = scmp.eq.s32.totalorder %s18, 3
      %p97 = por %p95, %p96
      %p99 = scmp.ne.s32.totalorder %s84, %s98
      %p100 = scmp.eq.s32.totalorder %s18, 0
      %p101 = por %p99, %p100
      %s102 = ssub.s32 %s19, %s31
      %s103 = ssub.s32 %s20, %s27
      %s104 = sor.u32 %s102, %s103
      %p105 = scmp.eq.s32.totalorder %s104, 0
      %s107 = sadd.s32 %s106, 1
      %s108 = scalar_select %p105, %s106, %s107
      %p111 = pneg %p105
      %p112 = scmp.eq.s32.totalorder %s12, 3
      %p113 = por %p111, %p112
      %p114 = scmp.ne.s32.totalorder %s106, %s109
      %p115 = scmp.eq.s32.totalorder %s12, 0
      %p116 = por %p114, %p115
      %p117 = scmp.ne.s32.totalorder %s106, %s109
      %p118 = scmp.eq.s32.totalorder %s17, 3
      %p119 = por %p117, %p118
      %p120 = scmp.ne.s32.totalorder %s109, %s110
      %p121 = scmp.eq.s32.totalorder %s17, 0
      %p122 = por %p120, %p121
      %p123 = scmp.ne.s32.totalorder %s109, %s110
      %p124 = scmp.eq.s32.totalorder %s18, 3
      %p125 = por %p123, %p124
      %p127 = scmp.ne.s32.totalorder %s110, %s126
      %p128 = scmp.eq.s32.totalorder %s18, 0
      %p129 = por %p127, %p128
      %s130 = ssub.s32 %s19, %s31
      %s131 = ssub.s32 %s20, %s27
      %s132 = sor.u32 %s130, %s131
      %p133 = scmp.eq.s32.totalorder %s132, 0
      %s135 = sadd.s32 %s134, 1
      %s136 = scalar_select %p133, %s134, %s135
      %p139 = pneg %p133
      %p140 = scmp.eq.s32.totalorder %s12, 3
      %p141 = por %p139, %p140
      %p142 = scmp.ne.s32.totalorder %s134, %s137
      %p143 = scmp.eq.s32.totalorder %s12, 0
      %p144 = por %p142, %p143
      %p145 = scmp.ne.s32.totalorder %s134, %s137
      %p146 = scmp.eq.s32.totalorder %s17, 3
      %p147 = por %p145, %p146
      %p148 = scmp.ne.s32.totalorder %s137, %s138
      %p149 = scmp.eq.s32.totalorder %s17, 0
      %p150 = por %p148, %p149
      %p151 = scmp.ne.s32.totalorder %s137, %s138
      %p152 = scmp.eq.s32.totalorder %s18, 3
      %p153 = por %p151, %p152
      %p155 = scmp.ne.s32.totalorder %s138, %s154
      %p156 = scmp.eq.s32.totalorder %s18, 0
      %p157 = por %p155, %p156
      %s158 = ssub.s32 %s19, %s31
      %s159 = ssub.s32 %s20, %s27
      %s160 = sor.u32 %s158, %s159
      %p161 = scmp.eq.s32.totalorder %s160, 0
      %s163 = sadd.s32 %s162, 1
      %s164 = scalar_select %p161, %s162, %s163
      %p167 = pneg %p161
      %p168 = scmp.eq.s32.totalorder %s12, 3
      %p169 = por %p167, %p168
      %p170 = scmp.ne.s32.totalorder %s162, %s165
      %p171 = scmp.eq.s32.totalorder %s12, 0
      %p172 = por %p170, %p171
      %p173 = scmp.ne.s32.totalorder %s162, %s165
      %p174 = scmp.eq.s32.totalorder %s17, 3
      %p175 = por %p173, %p174
      %p176 = scmp.ne.s32.totalorder %s165, %s166
      %p177 = scmp.eq.s32.totalorder %s17, 0
      %p178 = por %p176, %p177
      %p179 = scmp.ne.s32.totalorder %s165, %s166
      %p180 = scmp.eq.s32.totalorder %s18, 3
      %p181 = por %p179, %p180
      %p183 = scmp.ne.s32.totalorder %s166, %s182
      %p184 = scmp.eq.s32.totalorder %s18, 0
      %p185 = por %p183, %p184
      %p186 = scmp.le.s32.totalorder 1, %s12
      %p187 = scmp.lt.s32.totalorder %s12, 5
      %p188 = pnand %p186, %p187
      %p189 = pneg %p188
      // Predicated region
      $region9: #{tpu_custom_call.1} parent=5 // pred_check
        _
      $region10: #{tpu_custom_call.1} parent=5 // pred_check_branch
        %191 = sbr.rel (%p188) target = $region12
      $region11: #{tpu_custom_call.1} parent=5 // pred_region
        %s192 = ssub.s32 %s12, 1
        // Predicated region
        $region13: #{tpu_custom_call.1} parent=11 // pred_check
          %p193 = pneg %p73
        $region14: #{tpu_custom_call.1} parent=11 // pred_check_branch
          %195 = sbr.rel (%p193) target = $region16
        $region15: #{tpu_custom_call.1} parent=11 // pred_region
          _
        $region16: #{tpu_custom_call.1} parent=11 // pred_fallthru
          _
        // Predicated region
        $region17: #{tpu_custom_call.1} parent=11 // pred_check
          %p196 = pneg %p94
        $region18: #{tpu_custom_call.1} parent=11 // pred_check_branch
          %198 = sbr.rel (%p196) target = $region20
        $region19: #{tpu_custom_call.1} parent=11 // pred_region
          _
        $region20: #{tpu_custom_call.1} parent=11 // pred_fallthru
          _
      $region12: #{tpu_custom_call.1} parent=5 // pred_fallthru
        _
      %p199 = scmp.lt.s32.totalorder %s12, 4
      // Predicated region
      $region21: #{tpu_custom_call.1} parent=5 // pred_check
        %p200 = pneg %p199
      $region22: #{tpu_custom_call.1} parent=5 // pred_check_branch
        %202 = sbr.rel (%p200) target = $region24
      $region23: #{tpu_custom_call.1} parent=5 // pred_region
        // Predicated region
        $region25: #{tpu_custom_call.1} parent=23 // pred_check
          %p203 = pneg %p46
        $region26: #{tpu_custom_call.1} parent=23 // pred_check_branch
          %205 = sbr.rel (%p203) target = $region28
        $region27: #{tpu_custom_call.1} parent=23 // pred_region
          %s206 = smul.u32 4, %s20
          %p207 = scmp.lt.s32.totalorder %s19, 1
          %s208 = scalar_select %p207, %s19, 1
          %p209 = scmp.lt.s32.totalorder %s206, 7
          %s210 = scalar_select %p209, %s206, 7
          %s211 = smul.addr %s208, 8
          %s212 = sadd.s32 %s210, %s211
          %s213 = smul.addr %s212, 8
          %s214 = scalar_lea.vmem %s0, %s213
          %s215 = smul.u32 4, %s20
        $region28: #{tpu_custom_call.1} parent=23 // pred_fallthru
          _
      $region24: #{tpu_custom_call.1} parent=5 // pred_fallthru
        _
      %p216 = scmp.le.s32.totalorder 1, %s12
      %p217 = scmp.lt.s32.totalorder %s12, 5
      %p218 = pnand %p216, %p217
      %p219 = pneg %p218
      // Predicated region
      $region29: #{tpu_custom_call.1} parent=5 // pred_check
        _
      $region30: #{tpu_custom_call.1} parent=5 // pred_check_branch
        %221 = sbr.rel (%p218) target = $region32
      $region31: #{tpu_custom_call.1} parent=5 // pred_region
        %s222 = ssub.s32 %s12, 1
        %s223 = smul.u32 4, %s22
        %p224 = scmp.lt.s32.totalorder %s21, 1
        %s225 = scalar_select %p224, %s21, 1
        %p226 = scmp.lt.s32.totalorder %s223, 7
        %s227 = scalar_select %p226, %s223, 7
        %s228 = smul.addr %s225, 8
        %s229 = sadd.s32 %s227, %s228
        %s230 = smul.addr %s229, 8
        %s231 = scalar_lea.vmem %s0, %s230
        %p232 = pneg %p52
        %p233 = pneg %p49
        %p234 = pneg %p73
        %p235 = pneg %p70
        %p236 = pneg %p94
        %p237 = pneg %p91
        %p238 = pneg %p122
        %p239 = pneg %p119
        %s240 = sand.u32 %s109, 1
        %s241 = sand.u32 %s109, 1
        %s242 = smul.addr %s241, 128
        %s243 = scalar_lea.vmem [#allocation2], %s242
        %p244 = pneg %p150
        %p245 = pneg %p147
        %s246 = sand.u32 %s137, 1
        %s247 = sand.u32 %s137, 1
        %s248 = smul.addr %s247, 128
        %s249 = scalar_lea.vmem [#allocation3], %s248
        %p250 = pneg %p178
        %p251 = pneg %p175
        %s252 = sand.u32 %s165, 1
        %s253 = sand.u32 %s165, 1
        %s254 = smul.addr %s253, 128
        %s255 = scalar_lea.vmem [#allocation4], %s254
        %s256 = smul.u32 4, %s22
        %p257 = scmp.lt.s32.totalorder %s21, 1
        %s258 = scalar_select %p257, %s21, 1
        %p259 = scmp.lt.s32.totalorder %s256, 7
        %s260 = scalar_select %p259, %s256, 7
        %s261 = smul.addr %s258, 8
        %s262 = sadd.s32 %s260, %s261
        %s263 = smul.addr %s262, 8
        %s264 = scalar_lea.vmem %s0, %s263
        %s265 = smul.u32 4, %s22
        %s266 = smul.u32 4, %s22
        %s267 = smul.u32 4, %s22
        %s268 = smul.u32 4, %s22
        %v269 = vld [vmem:[%s264] sm:$0xff]
        %v270 = vld [vmem:[%s264 + $0x8] sm:$0xff]
        %v271 = vld [vmem:[%s264 + $0x10] sm:$0xff]
        %v272 = vld [vmem:[%s264 + $0x18] sm:$0xff]
        %v273 = vld [vmem:[%s1] sm:$0xff]
        %v274 = vld [vmem:[%s1 + $0x8] sm:$0xff]
        %v275 = vld [vmem:[%s1 + $0x10] sm:$0xff]
        %v276 = vld [vmem:[%s1 + $0x18] sm:$0xff]
        %v277 = vld [vmem:[%s2] sm:$0x1]
        %v279 = vlaneseq
        %v280 = vshrl.u32 %v279, 7
        %v281 = vsub.s32 0, %v280
        %v282 = vrot.slane %v277, %v281
        %vm284 = vcmask 261120
        %v286 = vsel %vm284, %v269, 0
        %v289 = vsel %vm284, %v270, 0
        %v292 = vsel %vm284, %v271, 0
        %v295 = vsel %vm284, %v272, 0
        %297 = vmatprep.subr.mxu0 0.0
        %298 = vmatpush1.msra.mxu0 %v273
        %299 = vmatprep.subr.mxu0 0.0
        %300 = vmatpush1.msra.mxu0 %v274
        %301 = vmatprep.subr.mxu0 0.0
        %302 = vmatpush1.msra.mxu0 %v275
        %303 = vmatprep.subr.mxu0 0.0
        %304 = vmatpush1.msra.mxu0 %v276
        %305 = vmatprep.subr.mxu0 0.0
        %306 = vmatpush1.msra.mxu0 0.0
        %307 = vmatprep.subr.mxu0 0.0
        %308 = vmatpush1.msra.mxu0 0.0
        %309 = vmatprep.subr.mxu0 0.0
        %310 = vmatpush1.msra.mxu0 0.0
        %311 = vmatprep.subr.mxu0 0.0
        %312 = vmatpush1.msra.mxu0 0.0
        %313 = vmatprep.subr.mxu0 0.0
        %314 = vmatpush1.msra.mxu0 0.0
        %315 = vmatprep.subr.mxu0 0.0
        %316 = vmatpush1.msra.mxu0 0.0
        %317 = vmatprep.subr.mxu0 0.0
        %318 = vmatpush1.msra.mxu0 0.0
        %319 = vmatprep.subr.mxu0 0.0
        %320 = vmatpush1.msra.mxu0 0.0
        %321 = vmatprep.subr.mxu0 0.0
        %322 = vmatpush1.msra.mxu0 0.0
        %323 = vmatprep.subr.mxu0 0.0
        %324 = vmatpush1.msra.mxu0 0.0
        %325 = vmatprep.subr.mxu0 0.0
        %326 = vmatpush1.msra.mxu0 0.0
        %327 = vmatprep.subr.mxu0 0.0
        %328 = vmatpush1.msra.mxu0 0.0
        %329 = vmatprep.subr.mxu0 0.0
        %330 = vmatpush1.msra.mxu0 0.0
        %331 = vmatprep.subr.mxu0 0.0
        %332 = vmatpush1.msra.mxu0 0.0
        %333 = vmatprep.subr.mxu0 0.0
        %334 = vmatpush1.msra.mxu0 0.0
        %335 = vmatprep.subr.mxu0 0.0
        %336 = vmatpush1.msra.mxu0 0.0
        %337 = vmatprep.subr.mxu0 0.0
        %338 = vmatpush1.msra.mxu0 0.0
        %339 = vmatprep.subr.mxu0 0.0
        %340 = vmatpush1.msra.mxu0 0.0
        %341 = vmatprep.subr.mxu0 0.0
        %342 = vmatpush1.msra.mxu0 0.0
        %343 = vmatprep.subr.mxu0 0.0
        %344 = vmatpush1.msra.mxu0 0.0
        %345 = vmatprep.subr.mxu0 0.0
        %346 = vmatpush1.msra.mxu0 0.0
        %347 = vmatprep.subr.mxu0 0.0
        %348 = vmatpush1.msra.mxu0 0.0
        %349 = vmatprep.subr.mxu0 0.0
        %350 = vmatpush1.msra.mxu0 0.0
        %351 = vmatprep.subr.mxu0 0.0
        %352 = vmatpush1.msra.mxu0 0.0
        %353 = vmatprep.subr.mxu0 0.0
        %354 = vmatpush1.msra.mxu0 0.0
        %355 = vmatprep.subr.mxu0 0.0
        %356 = vmatpush1.msra.mxu0 0.0
        %357 = vmatprep.subr.mxu0 0.0
        %358 = vmatpush1.msra.mxu0 0.0
        %359 = vmatprep.subr.mxu0 0.0
        %360 = vmatpush1.msra.mxu0 0.0
        %361 = vmatprep.mubr.f32.mxu0 0.0
        %362 = vmatmul.mubr.f32.gmra.mrb[0].mxu0 %v286
        %v363 = vpop.f32.mrb[0].mxu0
        %v364 = vadd.f32 %v282, %v363
        %v365 = vpop.f32.mrb[0].mxu0
        %366 = vmatprep.mubr.f32.mxu0 0.0
        %367 = vmatmul.mubr.f32.gmra.mrb[0].mxu0 %v289
        %v368 = vpop.f32.mrb[0].mxu0
        %v369 = vadd.f32 %v282, %v368
        %v370 = vpop.f32.mrb[0].mxu0
        %371 = vmatprep.mubr.f32.mxu0 0.0
        %372 = vmatmul.mubr.f32.gmra.mrb[0].mxu0 %v292
        %v373 = vpop.f32.mrb[0].mxu0
        %v374 = vadd.f32 %v282, %v373
        %v375 = vpop.f32.mrb[0].mxu0
        %376 = vmatprep.mubr.f32.mxu0 0.0
        %377 = vmatmul.mubr.f32.gmra.mrb[0].mxu0 %v295
        %v378 = vpop.f32.mrb[0].mxu0
        %v379 = vadd.f32 %v282, %v378
        %v380 = vpop.f32.mrb[0].mxu0
        %381 = vdwg.mxu0
        %vm382 = vcmask 64512
        %383 = vst.msk [vmem:[%s243] sm:$0xff] %vm382, %v364
        %384 = vst.msk [vmem:[%s243 + $0x8] sm:$0xff] %vm382, %v369
        %385 = vst.msk [vmem:[%s243 + $0x10] sm:$0xff] %vm382, %v374
        %386 = vst.msk [vmem:[%s243 + $0x18] sm:$0xff] %vm382, %v379
        %391 = vrot.lane.b32.xlu0 %v364, 96
        %v392 = vpop.permute.xlu0 %391
        %393 = vrot.lane.b32.xlu0 %v369, 96
        %v394 = vpop.permute.xlu0 %393
        %395 = vrot.lane.b32.xlu0 %v374, 96
        %v396 = vpop.permute.xlu0 %395
        %397 = vrot.lane.b32.xlu0 %v379, 96
        %v398 = vpop.permute.xlu0 %397
        %403 = vst.msk [vmem:[%s249] sm:$0xff] %vm382, %v392
        %404 = vst.msk [vmem:[%s249 + $0x8] sm:$0xff] %vm382, %v394
        %405 = vst.msk [vmem:[%s249 + $0x10] sm:$0xff] %vm382, %v396
        %406 = vst.msk [vmem:[%s249 + $0x18] sm:$0xff] %vm382, %v398
        %407 = vrot.lane.b32.xlu0 %v364, 64
        %v408 = vpop.permute.xlu0 %407
        %409 = vrot.lane.b32.xlu0 %v369, 64
        %v410 = vpop.permute.xlu0 %409
        %411 = vrot.lane.b32.xlu0 %v374, 64
        %v412 = vpop.permute.xlu0 %411
        %413 = vrot.lane.b32.xlu0 %v379, 64
        %v414 = vpop.permute.xlu0 %413
        %419 = vst.msk [vmem:[%s255] sm:$0xff] %vm382, %v408
        %420 = vst.msk [vmem:[%s255 + $0x8] sm:$0xff] %vm382, %v410
        %421 = vst.msk [vmem:[%s255 + $0x10] sm:$0xff] %vm382, %v412
        %422 = vst.msk [vmem:[%s255 + $0x18] sm:$0xff] %vm382, %v414
        %423 = vrot.lane.b32.xlu0 %v364, 120
        %v424 = vpop.permute.xlu0 %423
        %425 = vrot.lane.b32.xlu0 %v369, 120
        %v426 = vpop.permute.xlu0 %425
        %427 = vrot.lane.b32.xlu0 %v374, 120
        %v428 = vpop.permute.xlu0 %427
        %429 = vrot.lane.b32.xlu0 %v379, 120
        %v430 = vpop.permute.xlu0 %429
        %s435 = scalar_lea.vmem %s243, 32 [#allocation2]
        %436 = vst.msk [vmem:[%s435] sm:$0xff] %vm382, %v424
        %437 = vst.msk [vmem:[%s435 + $0x8] sm:$0xff] %vm382, %v426
        %438 = vst.msk [vmem:[%s435 + $0x10] sm:$0xff] %vm382, %v428
        %439 = vst.msk [vmem:[%s435 + $0x18] sm:$0xff] %vm382, %v430
        %440 = vrot.lane.b32.xlu0 %v364, 88
        %v441 = vpop.permute.xlu0 %440
        %442 = vrot.lane.b32.xlu0 %v369, 88
        %v443 = vpop.permute.xlu0 %442
        %444 = vrot.lane.b32.xlu0 %v374, 88
        %v445 = vpop.permute.xlu0 %444
        %446 = vrot.lane.b32.xlu0 %v379, 88
        %v447 = vpop.permute.xlu0 %446
        %s452 = scalar_lea.vmem %s249, 32 [#allocation3]
        %453 = vst.msk [vmem:[%s452] sm:$0xff] %vm382, %v441
        %454 = vst.msk [vmem:[%s452 + $0x8] sm:$0xff] %vm382, %v443
        %455 = vst.msk [vmem:[%s452 + $0x10] sm:$0xff] %vm382, %v445
        %456 = vst.msk [vmem:[%s452 + $0x18] sm:$0xff] %vm382, %v447
        %457 = vrot.lane.b32.xlu0 %v364, 56
        %v458 = vpop.permute.xlu0 %457
        %459 = vrot.lane.b32.xlu0 %v369, 56
        %v460 = vpop.permute.xlu0 %459
        %461 = vrot.lane.b32.xlu0 %v374, 56
        %v462 = vpop.permute.xlu0 %461
        %463 = vrot.lane.b32.xlu0 %v379, 56
        %v464 = vpop.permute.xlu0 %463
        %s469 = scalar_lea.vmem %s255, 32 [#allocation4]
        %470 = vst.msk [vmem:[%s469] sm:$0xff] %vm382, %v458
        %471 = vst.msk [vmem:[%s469 + $0x8] sm:$0xff] %vm382, %v460
        %472 = vst.msk [vmem:[%s469 + $0x10] sm:$0xff] %vm382, %v462
        %473 = vst.msk [vmem:[%s469 + $0x18] sm:$0xff] %vm382, %v464
        %474 = vrot.lane.b32.xlu0 %v364, 112
        %v475 = vpop.permute.xlu0 %474
        %476 = vrot.lane.b32.xlu0 %v369, 112
        %v477 = vpop.permute.xlu0 %476
        %478 = vrot.lane.b32.xlu0 %v374, 112
        %v479 = vpop.permute.xlu0 %478
        %480 = vrot.lane.b32.xlu0 %v379, 112
        %v481 = vpop.permute.xlu0 %480
        %s486 = scalar_lea.vmem %s243, 64 [#allocation2]
        %487 = vst.msk [vmem:[%s486] sm:$0xff] %vm382, %v475
        %488 = vst.msk [vmem:[%s486 + $0x8] sm:$0xff] %vm382, %v477
        %489 = vst.msk [vmem:[%s486 + $0x10] sm:$0xff] %vm382, %v479
        %490 = vst.msk [vmem:[%s486 + $0x18] sm:$0xff] %vm382, %v481
        %491 = vrot.lane.b32.xlu0 %v364, 80
        %v492 = vpop.permute.xlu0 %491
        %493 = vrot.lane.b32.xlu0 %v369, 80
        %v494 = vpop.permute.xlu0 %493
        %495 = vrot.lane.b32.xlu0 %v374, 80
        %v496 = vpop.permute.xlu0 %495
        %497 = vrot.lane.b32.xlu0 %v379, 80
        %v498 = vpop.permute.xlu0 %497
        %s503 = scalar_lea.vmem %s249, 64 [#allocation3]
        %504 = vst.msk [vmem:[%s503] sm:$0xff] %vm382, %v492
        %505 = vst.msk [vmem:[%s503 + $0x8] sm:$0xff] %vm382, %v494
        %506 = vst.msk [vmem:[%s503 + $0x10] sm:$0xff] %vm382, %v496
        %507 = vst.msk [vmem:[%s503 + $0x18] sm:$0xff] %vm382, %v498
        %508 = vrot.lane.b32.xlu0 %v364, 48
        %v509 = vpop.permute.xlu0 %508
        %510 = vrot.lane.b32.xlu0 %v369, 48
        %v511 = vpop.permute.xlu0 %510
        %512 = vrot.lane.b32.xlu0 %v374, 48
        %v513 = vpop.permute.xlu0 %512
        %514 = vrot.lane.b32.xlu0 %v379, 48
        %v515 = vpop.permute.xlu0 %514
        %s520 = scalar_lea.vmem %s255, 64 [#allocation4]
        %521 = vst.msk [vmem:[%s520] sm:$0xff] %vm382, %v509
        %522 = vst.msk [vmem:[%s520 + $0x8] sm:$0xff] %vm382, %v511
        %523 = vst.msk [vmem:[%s520 + $0x10] sm:$0xff] %vm382, %v513
        %524 = vst.msk [vmem:[%s520 + $0x18] sm:$0xff] %vm382, %v515
        %525 = vrot.lane.b32.xlu0 %v364, 104
        %v526 = vpop.permute.xlu0 %525
        %527 = vrot.lane.b32.xlu0 %v369, 104
        %v528 = vpop.permute.xlu0 %527
        %529 = vrot.lane.b32.xlu0 %v374, 104
        %v530 = vpop.permute.xlu0 %529
        %531 = vrot.lane.b32.xlu0 %v379, 104
        %v532 = vpop.permute.xlu0 %531
        %s537 = scalar_lea.vmem %s243, 96 [#allocation2]
        %538 = vst.msk [vmem:[%s537] sm:$0xff] %vm382, %v526
        %539 = vst.msk [vmem:[%s537 + $0x8] sm:$0xff] %vm382, %v528
        %540 = vst.msk [vmem:[%s537 + $0x10] sm:$0xff] %vm382, %v530
        %541 = vst.msk [vmem:[%s537 + $0x18] sm:$0xff] %vm382, %v532
        %542 = vrot.lane.b32.xlu0 %v364, 72
        %v543 = vpop.permute.xlu0 %542
        %544 = vrot.lane.b32.xlu0 %v369, 72
        %v545 = vpop.permute.xlu0 %544
        %546 = vrot.lane.b32.xlu0 %v374, 72
        %v547 = vpop.permute.xlu0 %546
        %548 = vrot.lane.b32.xlu0 %v379, 72
        %v549 = vpop.permute.xlu0 %548
        %s554 = scalar_lea.vmem %s249, 96 [#allocation3]
        %555 = vst.msk [vmem:[%s554] sm:$0xff] %vm382, %v543
        %556 = vst.msk [vmem:[%s554 + $0x8] sm:$0xff] %vm382, %v545
        %557 = vst.msk [vmem:[%s554 + $0x10] sm:$0xff] %vm382, %v547
        %558 = vst.msk [vmem:[%s554 + $0x18] sm:$0xff] %vm382, %v549
        %559 = vrot.lane.b32.xlu0 %v364, 40
        %v560 = vpop.permute.xlu0 %559
        %561 = vrot.lane.b32.xlu0 %v369, 40
        %v562 = vpop.permute.xlu0 %561
        %563 = vrot.lane.b32.xlu0 %v374, 40
        %v564 = vpop.permute.xlu0 %563
        %565 = vrot.lane.b32.xlu0 %v379, 40
        %v566 = vpop.permute.xlu0 %565
        %s571 = scalar_lea.vmem %s255, 96 [#allocation4]
        %572 = vst.msk [vmem:[%s571] sm:$0xff] %vm382, %v560
        %573 = vst.msk [vmem:[%s571 + $0x8] sm:$0xff] %vm382, %v562
        %574 = vst.msk [vmem:[%s571 + $0x10] sm:$0xff] %vm382, %v564
        %575 = vst.msk [vmem:[%s571 + $0x18] sm:$0xff] %vm382, %v566
        %s576 = sand.u32 %s109, 1
        %s577 = sand.u32 %s109, 1
        %s578 = smul.addr %s577, 128
        %s579 = scalar_lea.vmem [#allocation2], %s578
        %s580 = sand.u32 %s137, 1
        %s581 = sand.u32 %s137, 1
        %s582 = smul.addr %s581, 128
        %s583 = scalar_lea.vmem [#allocation3], %s582
        %s584 = sand.u32 %s165, 1
        %s585 = sand.u32 %s165, 1
        %s586 = smul.addr %s585, 128
        %s587 = scalar_lea.vmem [#allocation4], %s586
        // Predicated region
        $region33: #{tpu_custom_call.1} parent=31 // pred_check
          %p588 = pneg %p119
        $region34: #{tpu_custom_call.1} parent=31 // pred_check_branch
          %590 = sbr.rel (%p588) target = $region36
        $region35: #{tpu_custom_call.1} parent=31 // pred_region
          %s591 = smul.u32 4, %s22
          %s592 = smul.addr %s21, 32
          %s593 = sadd.s32 %s591, %s592
          %s594 = smul.addr %s593, 8
          %s595 = scalar_lea.vmem %s3, %s594
          // Predicated region
          $region37: #{tpu_custom_call.1} parent=35 // pred_check
            _
          $region38: #{tpu_custom_call.1} parent=35 // pred_check_branch
            %597 = sbr.rel (0) target = $region40
          $region39: #{tpu_custom_call.1} parent=35 // pred_region
            // Predicated region
            $region41: #{tpu_custom_call.1} parent=39 // pred_check
              _
            $region42: #{tpu_custom_call.1} parent=39 // pred_check_branch
              %599 = sbr.rel (0) target = $region44
            $region43: #{tpu_custom_call.1} parent=39 // pred_region
              // Predicated region
              $region56: #{tpu_custom_call.1} parent=43 // pred_check
                _
              $region57: #{tpu_custom_call.1} parent=43 // pred_check_branch
                %644 = sbr.rel (0) target = $region59
              $region58: #{tpu_custom_call.1} parent=43 // pred_region
                loop: start=0, step=1, limit=1
                $region60: #{tpu_custom_call.1} parent=58 // loop_pre_header
                  _
                $region61: #{tpu_custom_call.1} parent=58 // loop_header
                  %s646 = sphi 0, %s650
                  %p647 = scmp.ge.s32.totalorder %s646, 1
                  %s651 = sphi %s579, %s579
                  %s652 = sphi %s595, %s595
                $region62: #{tpu_custom_call.1} parent=58 // loop_header_branch
                  %649 = sbr.rel (%p647) target = $region66
                $region63: #{tpu_custom_call.1} parent=58 // loop_body
                  %v653 = vld [vmem:[%s651] sm:$0xff]
                  %654 = vst [vmem:[%s652] sm:$0xff] %v653
                  %v655 = vld [vmem:[%s651 + $0x8] sm:$0xff]
                  %656 = vst [vmem:[%s652 + $0x8] sm:$0xff] %v655
                  %v657 = vld [vmem:[%s651 + $0x10] sm:$0xff]
                  %658 = vst [vmem:[%s652 + $0x10] sm:$0xff] %v657
                  %v659 = vld [vmem:[%s651 + $0x18] sm:$0xff]
                  %660 = vst [vmem:[%s652 + $0x18] sm:$0xff] %v659
                  %v661 = vld [vmem:[%s651 + $0x20] sm:$0xff]
                  %662 = vst [vmem:[%s652 + $0x40] sm:$0xff] %v661
                  %v663 = vld [vmem:[%s651 + $0x28] sm:$0xff]
                  %664 = vst [vmem:[%s652 + $0x48] sm:$0xff] %v663
                  %v665 = vld [vmem:[%s651 + $0x30] sm:$0xff]
                  %666 = vst [vmem:[%s652 + $0x50] sm:$0xff] %v665
                  %v667 = vld [vmem:[%s651 + $0x38] sm:$0xff]
                  %668 = vst [vmem:[%s652 + $0x58] sm:$0xff] %v667
                  %v669 = vld [vmem:[%s651 + $0x40] sm:$0xff]
                  %670 = vst [vmem:[%s652 + $0x80] sm:$0xff] %v669
                  %v671 = vld [vmem:[%s651 + $0x48] sm:$0xff]
                  %672 = vst [vmem:[%s652 + $0x88] sm:$0xff] %v671
                  %v673 = vld [vmem:[%s651 + $0x50] sm:$0xff]
                  %674 = vst [vmem:[%s652 + $0x90] sm:$0xff] %v673
                  %v675 = vld [vmem:[%s651 + $0x58] sm:$0xff]
                  %676 = vst [vmem:[%s652 + $0x98] sm:$0xff] %v675
                  %v677 = vld [vmem:[%s651 + $0x60] sm:$0xff]
                  %678 = vst [vmem:[%s652 + $0xc0] sm:$0xff] %v677
                  %v679 = vld [vmem:[%s651 + $0x68] sm:$0xff]
                  %680 = vst [vmem:[%s652 + $0xc8] sm:$0xff] %v679
                  %v681 = vld [vmem:[%s651 + $0x70] sm:$0xff]
                  %682 = vst [vmem:[%s652 + $0xd0] sm:$0xff] %v681
                  %v683 = vld [vmem:[%s651 + $0x78] sm:$0xff]
                  %684 = vst [vmem:[%s652 + $0xd8] sm:$0xff] %v683
                $region64: #{tpu_custom_call.1} parent=58 // loop_footer
                  %s650 = sadd.s32 1, %s646
                $region65: #{tpu_custom_call.1} parent=58 // loop_footer_branch
                  %645 = sbr.rel target = $region61
                $region66: #{tpu_custom_call.1} parent=58 // loop_exit
                  _
              $region59: #{tpu_custom_call.1} parent=43 // pred_fallthru
                _
              // Predicated region
              $region67: #{tpu_custom_call.1} parent=43 // pred_check
                _
              $region68: #{tpu_custom_call.1} parent=43 // pred_check_branch
                %686 = sbr.rel target = $region70
              $region69: #{tpu_custom_call.1} parent=43 // pred_region
                _
              $region70: #{tpu_custom_call.1} parent=43 // pred_fallthru
                _
            $region44: #{tpu_custom_call.1} parent=39 // pred_fallthru
              _
            // Predicated region
            $region45: #{tpu_custom_call.1} parent=39 // pred_check
              _
            $region46: #{tpu_custom_call.1} parent=39 // pred_check_branch
              %601 = sbr.rel target = $region48
            $region47: #{tpu_custom_call.1} parent=39 // pred_region
              loop: start=0, step=1, limit=1
              $region49: #{tpu_custom_call.1} parent=47 // loop_pre_header
                _
              $region50: #{tpu_custom_call.1} parent=47 // loop_header
                %s604 = sphi 0, %s608
                %p605 = scmp.ge.s32.totalorder %s604, 1
                %s609 = sphi %s579, %s579
                %s610 = sphi %s595, %s595
              $region51: #{tpu_custom_call.1} parent=47 // loop_header_branch
                %607 = sbr.rel (%p605) target = $region55
              $region52: #{tpu_custom_call.1} parent=47 // loop_body
                %v611 = vld [vmem:[%s609] sm:$0xff]
                %612 = vst [vmem:[%s610] sm:$0xff] %v611
                %v613 = vld [vmem:[%s609 + $0x8] sm:$0xff]
                %614 = vst [vmem:[%s610 + $0x8] sm:$0xff] %v613
                %v615 = vld [vmem:[%s609 + $0x10] sm:$0xff]
                %616 = vst [vmem:[%s610 + $0x10] sm:$0xff] %v615
                %v617 = vld [vmem:[%s609 + $0x18] sm:$0xff]
                %618 = vst [vmem:[%s610 + $0x18] sm:$0xff] %v617
                %v619 = vld [vmem:[%s609 + $0x20] sm:$0xff]
                %620 = vst [vmem:[%s610 + $0x40] sm:$0xff] %v619
                %v621 = vld [vmem:[%s609 + $0x28] sm:$0xff]
                %622 = vst [vmem:[%s610 + $0x48] sm:$0xff] %v621
                %v623 = vld [vmem:[%s609 + $0x30] sm:$0xff]
                %624 = vst [vmem:[%s610 + $0x50] sm:$0xff] %v623
                %v625 = vld [vmem:[%s609 + $0x38] sm:$0xff]
                %626 = vst [vmem:[%s610 + $0x58] sm:$0xff] %v625
                %v627 = vld [vmem:[%s609 + $0x40] sm:$0xff]
                %628 = vst [vmem:[%s610 + $0x80] sm:$0xff] %v627
                %v629 = vld [vmem:[%s609 + $0x48] sm:$0xff]
                %630 = vst [vmem:[%s610 + $0x88] sm:$0xff] %v629
                %v631 = vld [vmem:[%s609 + $0x50] sm:$0xff]
                %632 = vst [vmem:[%s610 + $0x90] sm:$0xff] %v631
                %v633 = vld [vmem:[%s609 + $0x58] sm:$0xff]
                %634 = vst [vmem:[%s610 + $0x98] sm:$0xff] %v633
                %v635 = vld [vmem:[%s609 + $0x60] sm:$0xff]
                %636 = vst [vmem:[%s610 + $0xc0] sm:$0xff] %v635
                %v637 = vld [vmem:[%s609 + $0x68] sm:$0xff]
                %638 = vst [vmem:[%s610 + $0xc8] sm:$0xff] %v637
                %v639 = vld [vmem:[%s609 + $0x70] sm:$0xff]
                %640 = vst [vmem:[%s610 + $0xd0] sm:$0xff] %v639
                %v641 = vld [vmem:[%s609 + $0x78] sm:$0xff]
                %642 = vst [vmem:[%s610 + $0xd8] sm:$0xff] %v641
              $region53: #{tpu_custom_call.1} parent=47 // loop_footer
                %s608 = sadd.s32 1, %s604
              $region54: #{tpu_custom_call.1} parent=47 // loop_footer_branch
                %603 = sbr.rel target = $region50
              $region55: #{tpu_custom_call.1} parent=47 // loop_exit
                _
            $region48: #{tpu_custom_call.1} parent=39 // pred_fallthru
              _
          $region40: #{tpu_custom_call.1} parent=35 // pred_fallthru
            _
          %687 = vnop
        $region36: #{tpu_custom_call.1} parent=31 // pred_fallthru
          _
        // Predicated region
        $region71: #{tpu_custom_call.1} parent=31 // pred_check
          %p688 = pneg %p147
        $region72: #{tpu_custom_call.1} parent=31 // pred_check_branch
          %690 = sbr.rel (%p688) target = $region74
        $region73: #{tpu_custom_call.1} parent=31 // pred_region
          %s691 = smul.u32 4, %s22
          %s692 = smul.addr %s21, 32
          %s693 = sadd.s32 %s691, %s692
          %s694 = smul.addr %s693, 8
          %s695 = scalar_lea.vmem %s4, %s694
          // Predicated region
          $region75: #{tpu_custom_call.1} parent=73 // pred_check
            _
          $region76: #{tpu_custom_call.1} parent=73 // pred_check_branch
            %697 = sbr.rel (0) target = $region78
          $region77: #{tpu_custom_call.1} parent=73 // pred_region
            // Predicated region
            $region79: #{tpu_custom_call.1} parent=77 // pred_check
              _
            $region80: #{tpu_custom_call.1} parent=77 // pred_check_branch
              %699 = sbr.rel (0) target = $region82
            $region81: #{tpu_custom_call.1} parent=77 // pred_region
              // Predicated region
              $region94: #{tpu_custom_call.1} parent=81 // pred_check
                _
              $region95: #{tpu_custom_call.1} parent=81 // pred_check_branch
                %744 = sbr.rel (0) target = $region97
              $region96: #{tpu_custom_call.1} parent=81 // pred_region
                loop: start=0, step=1, limit=1
                $region98: #{tpu_custom_call.1} parent=96 // loop_pre_header
                  _
                $region99: #{tpu_custom_call.1} parent=96 // loop_header
                  %s746 = sphi 0, %s750
                  %p747 = scmp.ge.s32.totalorder %s746, 1
                  %s751 = sphi %s583, %s583
                  %s752 = sphi %s695, %s695
                $region100: #{tpu_custom_call.1} parent=96 // loop_header_branch
                  %749 = sbr.rel (%p747) target = $region104
                $region101: #{tpu_custom_call.1} parent=96 // loop_body
                  %v753 = vld [vmem:[%s751] sm:$0xff]
                  %754 = vst [vmem:[%s752] sm:$0xff] %v753
                  %v755 = vld [vmem:[%s751 + $0x8] sm:$0xff]
                  %756 = vst [vmem:[%s752 + $0x8] sm:$0xff] %v755
                  %v757 = vld [vmem:[%s751 + $0x10] sm:$0xff]
                  %758 = vst [vmem:[%s752 + $0x10] sm:$0xff] %v757
                  %v759 = vld [vmem:[%s751 + $0x18] sm:$0xff]
                  %760 = vst [vmem:[%s752 + $0x18] sm:$0xff] %v759
                  %v761 = vld [vmem:[%s751 + $0x20] sm:$0xff]
                  %762 = vst [vmem:[%s752 + $0x40] sm:$0xff] %v761
                  %v763 = vld [vmem:[%s751 + $0x28] sm:$0xff]
                  %764 = vst [vmem:[%s752 + $0x48] sm:$0xff] %v763
                  %v765 = vld [vmem:[%s751 + $0x30] sm:$0xff]
                  %766 = vst [vmem:[%s752 + $0x50] sm:$0xff] %v765
                  %v767 = vld [vmem:[%s751 + $0x38] sm:$0xff]
                  %768 = vst [vmem:[%s752 + $0x58] sm:$0xff] %v767
                  %v769 = vld [vmem:[%s751 + $0x40] sm:$0xff]
                  %770 = vst [vmem:[%s752 + $0x80] sm:$0xff] %v769
                  %v771 = vld [vmem:[%s751 + $0x48] sm:$0xff]
                  %772 = vst [vmem:[%s752 + $0x88] sm:$0xff] %v771
                  %v773 = vld [vmem:[%s751 + $0x50] sm:$0xff]
                  %774 = vst [vmem:[%s752 + $0x90] sm:$0xff] %v773
                  %v775 = vld [vmem:[%s751 + $0x58] sm:$0xff]
                  %776 = vst [vmem:[%s752 + $0x98] sm:$0xff] %v775
                  %v777 = vld [vmem:[%s751 + $0x60] sm:$0xff]
                  %778 = vst [vmem:[%s752 + $0xc0] sm:$0xff] %v777
                  %v779 = vld [vmem:[%s751 + $0x68] sm:$0xff]
                  %780 = vst [vmem:[%s752 + $0xc8] sm:$0xff] %v779
                  %v781 = vld [vmem:[%s751 + $0x70] sm:$0xff]
                  %782 = vst [vmem:[%s752 + $0xd0] sm:$0xff] %v781
                  %v783 = vld [vmem:[%s751 + $0x78] sm:$0xff]
                  %784 = vst [vmem:[%s752 + $0xd8] sm:$0xff] %v783
                $region102: #{tpu_custom_call.1} parent=96 // loop_footer
                  %s750 = sadd.s32 1, %s746
                $region103: #{tpu_custom_call.1} parent=96 // loop_footer_branch
                  %745 = sbr.rel target = $region99
                $region104: #{tpu_custom_call.1} parent=96 // loop_exit
                  _
              $region97: #{tpu_custom_call.1} parent=81 // pred_fallthru
                _
              // Predicated region
              $region105: #{tpu_custom_call.1} parent=81 // pred_check
                _
              $region106: #{tpu_custom_call.1} parent=81 // pred_check_branch
                %786 = sbr.rel target = $region108
              $region107: #{tpu_custom_call.1} parent=81 // pred_region
                _
              $region108: #{tpu_custom_call.1} parent=81 // pred_fallthru
                _
            $region82: #{tpu_custom_call.1} parent=77 // pred_fallthru
              _
            // Predicated region
            $region83: #{tpu_custom_call.1} parent=77 // pred_check
              _
            $region84: #{tpu_custom_call.1} parent=77 // pred_check_branch
              %701 = sbr.rel target = $region86
            $region85: #{tpu_custom_call.1} parent=77 // pred_region
              loop: start=0, step=1, limit=1
              $region87: #{tpu_custom_call.1} parent=85 // loop_pre_header
                _
              $region88: #{tpu_custom_call.1} parent=85 // loop_header
                %s704 = sphi 0, %s708
                %p705 = scmp.ge.s32.totalorder %s704, 1
                %s709 = sphi %s583, %s583
                %s710 = sphi %s695, %s695
              $region89: #{tpu_custom_call.1} parent=85 // loop_header_branch
                %707 = sbr.rel (%p705) target = $region93
              $region90: #{tpu_custom_call.1} parent=85 // loop_body
                %v711 = vld [vmem:[%s709] sm:$0xff]
                %712 = vst [vmem:[%s710] sm:$0xff] %v711
                %v713 = vld [vmem:[%s709 + $0x8] sm:$0xff]
                %714 = vst [vmem:[%s710 + $0x8] sm:$0xff] %v713
                %v715 = vld [vmem:[%s709 + $0x10] sm:$0xff]
                %716 = vst [vmem:[%s710 + $0x10] sm:$0xff] %v715
                %v717 = vld [vmem:[%s709 + $0x18] sm:$0xff]
                %718 = vst [vmem:[%s710 + $0x18] sm:$0xff] %v717
                %v719 = vld [vmem:[%s709 + $0x20] sm:$0xff]
                %720 = vst [vmem:[%s710 + $0x40] sm:$0xff] %v719
                %v721 = vld [vmem:[%s709 + $0x28] sm:$0xff]
                %722 = vst [vmem:[%s710 + $0x48] sm:$0xff] %v721
                %v723 = vld [vmem:[%s709 + $0x30] sm:$0xff]
                %724 = vst [vmem:[%s710 + $0x50] sm:$0xff] %v723
                %v725 = vld [vmem:[%s709 + $0x38] sm:$0xff]
                %726 = vst [vmem:[%s710 + $0x58] sm:$0xff] %v725
                %v727 = vld [vmem:[%s709 + $0x40] sm:$0xff]
                %728 = vst [vmem:[%s710 + $0x80] sm:$0xff] %v727
                %v729 = vld [vmem:[%s709 + $0x48] sm:$0xff]
                %730 = vst [vmem:[%s710 + $0x88] sm:$0xff] %v729
                %v731 = vld [vmem:[%s709 + $0x50] sm:$0xff]
                %732 = vst [vmem:[%s710 + $0x90] sm:$0xff] %v731
                %v733 = vld [vmem:[%s709 + $0x58] sm:$0xff]
                %734 = vst [vmem:[%s710 + $0x98] sm:$0xff] %v733
                %v735 = vld [vmem:[%s709 + $0x60] sm:$0xff]
                %736 = vst [vmem:[%s710 + $0xc0] sm:$0xff] %v735
                %v737 = vld [vmem:[%s709 + $0x68] sm:$0xff]
                %738 = vst [vmem:[%s710 + $0xc8] sm:$0xff] %v737
                %v739 = vld [vmem:[%s709 + $0x70] sm:$0xff]
                %740 = vst [vmem:[%s710 + $0xd0] sm:$0xff] %v739
                %v741 = vld [vmem:[%s709 + $0x78] sm:$0xff]
                %742 = vst [vmem:[%s710 + $0xd8] sm:$0xff] %v741
              $region91: #{tpu_custom_call.1} parent=85 // loop_footer
                %s708 = sadd.s32 1, %s704
              $region92: #{tpu_custom_call.1} parent=85 // loop_footer_branch
                %703 = sbr.rel target = $region88
              $region93: #{tpu_custom_call.1} parent=85 // loop_exit
                _
            $region86: #{tpu_custom_call.1} parent=77 // pred_fallthru
              _
          $region78: #{tpu_custom_call.1} parent=73 // pred_fallthru
            _
          %787 = vnop
        $region74: #{tpu_custom_call.1} parent=31 // pred_fallthru
          _
        // Predicated region
        $region109: #{tpu_custom_call.1} parent=31 // pred_check
          %p788 = pneg %p175
        $region110: #{tpu_custom_call.1} parent=31 // pred_check_branch
          %790 = sbr.rel (%p788) target = $region112
        $region111: #{tpu_custom_call.1} parent=31 // pred_region
          %s791 = smul.u32 4, %s22
          %s792 = smul.addr %s21, 32
          %s793 = sadd.s32 %s791, %s792
          %s794 = smul.addr %s793, 8
          %s795 = scalar_lea.vmem %s5, %s794
          // Predicated region
          $region113: #{tpu_custom_call.1} parent=111 // pred_check
            _
          $region114: #{tpu_custom_call.1} parent=111 // pred_check_branch
            %797 = sbr.rel (0) target = $region116
          $region115: #{tpu_custom_call.1} parent=111 // pred_region
            // Predicated region
            $region117: #{tpu_custom_call.1} parent=115 // pred_check
              _
            $region118: #{tpu_custom_call.1} parent=115 // pred_check_branch
              %799 = sbr.rel (0) target = $region120
            $region119: #{tpu_custom_call.1} parent=115 // pred_region
              // Predicated region
              $region132: #{tpu_custom_call.1} parent=119 // pred_check
                _
              $region133: #{tpu_custom_call.1} parent=119 // pred_check_branch
                %844 = sbr.rel (0) target = $region135
              $region134: #{tpu_custom_call.1} parent=119 // pred_region
                loop: start=0, step=1, limit=1
                $region136: #{tpu_custom_call.1} parent=134 // loop_pre_header
                  _
                $region137: #{tpu_custom_call.1} parent=134 // loop_header
                  %s846 = sphi 0, %s850
                  %p847 = scmp.ge.s32.totalorder %s846, 1
                  %s851 = sphi %s587, %s587
                  %s852 = sphi %s795, %s795
                $region138: #{tpu_custom_call.1} parent=134 // loop_header_branch
                  %849 = sbr.rel (%p847) target = $region142
                $region139: #{tpu_custom_call.1} parent=134 // loop_body
                  %v853 = vld [vmem:[%s851] sm:$0xff]
                  %854 = vst [vmem:[%s852] sm:$0xff] %v853
                  %v855 = vld [vmem:[%s851 + $0x8] sm:$0xff]
                  %856 = vst [vmem:[%s852 + $0x8] sm:$0xff] %v855
                  %v857 = vld [vmem:[%s851 + $0x10] sm:$0xff]
                  %858 = vst [vmem:[%s852 + $0x10] sm:$0xff] %v857
                  %v859 = vld [vmem:[%s851 + $0x18] sm:$0xff]
                  %860 = vst [vmem:[%s852 + $0x18] sm:$0xff] %v859
                  %v861 = vld [vmem:[%s851 + $0x20] sm:$0xff]
                  %862 = vst [vmem:[%s852 + $0x40] sm:$0xff] %v861
                  %v863 = vld [vmem:[%s851 + $0x28] sm:$0xff]
                  %864 = vst [vmem:[%s852 + $0x48] sm:$0xff] %v863
                  %v865 = vld [vmem:[%s851 + $0x30] sm:$0xff]
                  %866 = vst [vmem:[%s852 + $0x50] sm:$0xff] %v865
                  %v867 = vld [vmem:[%s851 + $0x38] sm:$0xff]
                  %868 = vst [vmem:[%s852 + $0x58] sm:$0xff] %v867
                  %v869 = vld [vmem:[%s851 + $0x40] sm:$0xff]
                  %870 = vst [vmem:[%s852 + $0x80] sm:$0xff] %v869
                  %v871 = vld [vmem:[%s851 + $0x48] sm:$0xff]
                  %872 = vst [vmem:[%s852 + $0x88] sm:$0xff] %v871
                  %v873 = vld [vmem:[%s851 + $0x50] sm:$0xff]
                  %874 = vst [vmem:[%s852 + $0x90] sm:$0xff] %v873
                  %v875 = vld [vmem:[%s851 + $0x58] sm:$0xff]
                  %876 = vst [vmem:[%s852 + $0x98] sm:$0xff] %v875
                  %v877 = vld [vmem:[%s851 + $0x60] sm:$0xff]
                  %878 = vst [vmem:[%s852 + $0xc0] sm:$0xff] %v877
                  %v879 = vld [vmem:[%s851 + $0x68] sm:$0xff]
                  %880 = vst [vmem:[%s852 + $0xc8] sm:$0xff] %v879
                  %v881 = vld [vmem:[%s851 + $0x70] sm:$0xff]
                  %882 = vst [vmem:[%s852 + $0xd0] sm:$0xff] %v881
                  %v883 = vld [vmem:[%s851 + $0x78] sm:$0xff]
                  %884 = vst [vmem:[%s852 + $0xd8] sm:$0xff] %v883
                $region140: #{tpu_custom_call.1} parent=134 // loop_footer
                  %s850 = sadd.s32 1, %s846
                $region141: #{tpu_custom_call.1} parent=134 // loop_footer_branch
                  %845 = sbr.rel target = $region137
                $region142: #{tpu_custom_call.1} parent=134 // loop_exit
                  _
              $region135: #{tpu_custom_call.1} parent=119 // pred_fallthru
                _
              // Predicated region
              $region143: #{tpu_custom_call.1} parent=119 // pred_check
                _
              $region144: #{tpu_custom_call.1} parent=119 // pred_check_branch
                %886 = sbr.rel target = $region146
              $region145: #{tpu_custom_call.1} parent=119 // pred_region
                _
              $region146: #{tpu_custom_call.1} parent=119 // pred_fallthru
                _
            $region120: #{tpu_custom_call.1} parent=115 // pred_fallthru
              _
            // Predicated region
            $region121: #{tpu_custom_call.1} parent=115 // pred_check
              _
            $region122: #{tpu_custom_call.1} parent=115 // pred_check_branch
              %801 = sbr.rel target = $region124
            $region123: #{tpu_custom_call.1} parent=115 // pred_region
              loop: start=0, step=1, limit=1
              $region125: #{tpu_custom_call.1} parent=123 // loop_pre_header
                _
              $region126: #{tpu_custom_call.1} parent=123 // loop_header
                %s804 = sphi 0, %s808
                %p805 = scmp.ge.s32.totalorder %s804, 1
                %s809 = sphi %s587, %s587
                %s810 = sphi %s795, %s795
              $region127: #{tpu_custom_call.1} parent=123 // loop_header_branch
                %807 = sbr.rel (%p805) target = $region131
              $region128: #{tpu_custom_call.1} parent=123 // loop_body
                %v811 = vld [vmem:[%s809] sm:$0xff]
                %812 = vst [vmem:[%s810] sm:$0xff] %v811
                %v813 = vld [vmem:[%s809 + $0x8] sm:$0xff]
                %814 = vst [vmem:[%s810 + $0x8] sm:$0xff] %v813
                %v815 = vld [vmem:[%s809 + $0x10] sm:$0xff]
                %816 = vst [vmem:[%s810 + $0x10] sm:$0xff] %v815
                %v817 = vld [vmem:[%s809 + $0x18] sm:$0xff]
                %818 = vst [vmem:[%s810 + $0x18] sm:$0xff] %v817
                %v819 = vld [vmem:[%s809 + $0x20] sm:$0xff]
                %820 = vst [vmem:[%s810 + $0x40] sm:$0xff] %v819
                %v821 = vld [vmem:[%s809 + $0x28] sm:$0xff]
                %822 = vst [vmem:[%s810 + $0x48] sm:$0xff] %v821
                %v823 = vld [vmem:[%s809 + $0x30] sm:$0xff]
                %824 = vst [vmem:[%s810 + $0x50] sm:$0xff] %v823
                %v825 = vld [vmem:[%s809 + $0x38] sm:$0xff]
                %826 = vst [vmem:[%s810 + $0x58] sm:$0xff] %v825
                %v827 = vld [vmem:[%s809 + $0x40] sm:$0xff]
                %828 = vst [vmem:[%s810 + $0x80] sm:$0xff] %v827
                %v829 = vld [vmem:[%s809 + $0x48] sm:$0xff]
                %830 = vst [vmem:[%s810 + $0x88] sm:$0xff] %v829
                %v831 = vld [vmem:[%s809 + $0x50] sm:$0xff]
                %832 = vst [vmem:[%s810 + $0x90] sm:$0xff] %v831
                %v833 = vld [vmem:[%s809 + $0x58] sm:$0xff]
                %834 = vst [vmem:[%s810 + $0x98] sm:$0xff] %v833
                %v835 = vld [vmem:[%s809 + $0x60] sm:$0xff]
                %836 = vst [vmem:[%s810 + $0xc0] sm:$0xff] %v835
                %v837 = vld [vmem:[%s809 + $0x68] sm:$0xff]
                %838 = vst [vmem:[%s810 + $0xc8] sm:$0xff] %v837
                %v839 = vld [vmem:[%s809 + $0x70] sm:$0xff]
                %840 = vst [vmem:[%s810 + $0xd0] sm:$0xff] %v839
                %v841 = vld [vmem:[%s809 + $0x78] sm:$0xff]
                %842 = vst [vmem:[%s810 + $0xd8] sm:$0xff] %v841
              $region129: #{tpu_custom_call.1} parent=123 // loop_footer
                %s808 = sadd.s32 1, %s804
              $region130: #{tpu_custom_call.1} parent=123 // loop_footer_branch
                %803 = sbr.rel target = $region126
              $region131: #{tpu_custom_call.1} parent=123 // loop_exit
                _
            $region124: #{tpu_custom_call.1} parent=115 // pred_fallthru
              _
          $region116: #{tpu_custom_call.1} parent=111 // pred_fallthru
            _
          %887 = vnop
        $region112: #{tpu_custom_call.1} parent=31 // pred_fallthru
          _
      $region32: #{tpu_custom_call.1} parent=5 // pred_fallthru
        _
      %p888 = scmp.le.s32.totalorder 2, %s12
      // Predicated region
      $region147: #{tpu_custom_call.1} parent=5 // pred_check
        %p889 = pneg %p888
      $region148: #{tpu_custom_call.1} parent=5 // pred_check_branch
        %891 = sbr.rel (%p889) target = $region150
      $region149: #{tpu_custom_call.1} parent=5 // pred_region
        %s892 = ssub.s32 %s12, 2
        // Predicated region
        $region151: #{tpu_custom_call.1} parent=149 // pred_check
          %p893 = pneg %p125
        $region152: #{tpu_custom_call.1} parent=149 // pred_check_branch
          %895 = sbr.rel (%p893) target = $region154
        $region153: #{tpu_custom_call.1} parent=149 // pred_region
          %s896 = sand.u32 %s110, 1
          %s897 = sand.u32 %s110, 1
          %s898 = smul.addr %s897, 128
          %s899 = scalar_lea.vmem [#allocation2], %s898
        $region154: #{tpu_custom_call.1} parent=149 // pred_fallthru
          _
        // Predicated region
        $region155: #{tpu_custom_call.1} parent=149 // pred_check
          %p900 = pneg %p153
        $region156: #{tpu_custom_call.1} parent=149 // pred_check_branch
          %902 = sbr.rel (%p900) target = $region158
        $region157: #{tpu_custom_call.1} parent=149 // pred_region
          %s903 = sand.u32 %s138, 1
          %s904 = sand.u32 %s138, 1
          %s905 = smul.addr %s904, 128
          %s906 = scalar_lea.vmem [#allocation3], %s905
        $region158: #{tpu_custom_call.1} parent=149 // pred_fallthru
          _
        // Predicated region
        $region159: #{tpu_custom_call.1} parent=149 // pred_check
          %p907 = pneg %p181
        $region160: #{tpu_custom_call.1} parent=149 // pred_check_branch
          %909 = sbr.rel (%p907) target = $region162
        $region161: #{tpu_custom_call.1} parent=149 // pred_region
          %s910 = sand.u32 %s166, 1
          %s911 = sand.u32 %s166, 1
          %s912 = smul.addr %s911, 128
          %s913 = scalar_lea.vmem [#allocation4], %s912
        $region162: #{tpu_custom_call.1} parent=149 // pred_fallthru
          _
      $region150: #{tpu_custom_call.1} parent=5 // pred_fallthru
        _
    $region6: #{tpu_custom_call.1} parent=1 // loop_footer
      %s16 = sadd.s32 1, %s12
    $region7: #{tpu_custom_call.1} parent=1 // loop_footer_branch
      %11 = sbr.rel target = $region3
    $region8: #{tpu_custom_call.1} parent=1 // loop_exit
      _

</llo_original>
